<compile_context>
chip_gen: v6e
topology: v6e:2x2x1
jax: 0.10.0
libtpu: 0.0.40
codegen_flags: <defaults>
</compile_context>

<pallas_src>
import functools
import math

import jax
import jax.numpy as jnp
from jax.experimental import pallas as pl
from jax.experimental.pallas import tpu as pltpu

HIDDEN_1 = 256
HIDDEN_2 = 256
HIDDEN_3 = 256

SUBLANE = 8     # sublane count of a vreg


def _cdiv(a, b):
    return -(-a // b)


def _round_up(x, m):
    return ((x + m - 1) // m) * m


def _choose_tile(batch, batch_tile):
    """Pick the batch tile (static Python ints).

    Small batches: one block (no pipeline machinery).  Larger batches: an even,
    balanced number of blocks so a 2-TensorCore chip (v7x) splits work evenly.
    """
    if batch <= min(batch_tile, 512):
        return _round_up(batch, SUBLANE)
    nblk = max(2, _cdiv(batch, batch_tile))
    if nblk % 2:
        nblk += 1
    return _round_up(_cdiv(batch, nblk), SUBLANE)


def _mlp_kernel(x_ref, w1_ref, b1_ref, w2_ref, b2_ref, w3_ref, b3_ref,
                w4_ref, b4_ref, o_ref):
    # Layer 1: relu(x @ W1 + b1) — bf16 MXU inputs, f32 accumulation,
    # bias + ReLU in f32 on the VPU (v5e-safe).
    h = jnp.dot(x_ref[...].astype(jnp.bfloat16), w1_ref[...],
                preferred_element_type=jnp.float32)
    h = jnp.maximum(h + b1_ref[...], 0.0)
    # Layer 2
    h = jnp.dot(h.astype(jnp.bfloat16), w2_ref[...],
                preferred_element_type=jnp.float32)
    h = jnp.maximum(h + b2_ref[...], 0.0)
    # Layer 3
    h = jnp.dot(h.astype(jnp.bfloat16), w3_ref[...],
                preferred_element_type=jnp.float32)
    h = jnp.maximum(h + b3_ref[...], 0.0)
    # Output layer (no activation)
    out = jnp.dot(h.astype(jnp.bfloat16), w4_ref[...],
                  preferred_element_type=jnp.float32)
    o_ref[...] = (out + b4_ref[...]).astype(o_ref.dtype)


def prepare_params(params):
    """One-time parameter prep: weights -> bf16 (MXU-native), biases f32."""
    prepped = {}
    for i in range(1, 5):
        prepped[f"w{i}"] = params[f"w{i}"].astype(jnp.bfloat16)
        prepped[f"b{i}"] = params[f"b{i}"].astype(jnp.float32)
    return prepped


def network_forward(x, prepped, *, batch_tile=1024):
    """Fused forward pass of the 4-layer MLP.

    x: [B, input_size] float32 (unpadded).
    prepped: output of prepare_params — w1..w4 as [in, out] bf16, b1..b4 as
             [1, out] f32.
    """
    B, in_dim = x.shape
    out_dim = prepped["w4"].shape[1]

    tile = _choose_tile(B, batch_tile)
    grid = (_cdiv(B, tile),)

    w1, w2, w3, w4 = (prepped[f"w{i}"] for i in range(1, 5))
    b1, b2, b3, b4 = (prepped[f"b{i}"] for i in range(1, 5))

    def x_map(i):
        return (i, 0)

    def rep_map(i):  # weights / biases resident across all batch tiles
        return (0, 0)

    h1, h2, h3 = w1.shape[1], w2.shape[1], w3.shape[1]
    flops = 2 * B * (in_dim * h1 + h1 * h2 + h2 * h3 + h3 * out_dim)
    bytes_accessed = (
        x.size * 4
        + (w1.size + w2.size + w3.size + w4.size) * 2
        + (b1.size + b2.size + b3.size + b4.size) * 4
        + B * out_dim * 4)

    return pl.pallas_call(
        _mlp_kernel,
        out_shape=jax.ShapeDtypeStruct((B, out_dim), jnp.float32),
        grid_spec=pltpu.PrefetchScalarGridSpec(
            num_scalar_prefetch=0,
            grid=grid,
            in_specs=[
                pl.BlockSpec((tile, in_dim), x_map),
                pl.BlockSpec(w1.shape, rep_map),
                pl.BlockSpec(b1.shape, rep_map),
                pl.BlockSpec(w2.shape, rep_map),
                pl.BlockSpec(b2.shape, rep_map),
                pl.BlockSpec(w3.shape, rep_map),
                pl.BlockSpec(b3.shape, rep_map),
                pl.BlockSpec(w4.shape, rep_map),
                pl.BlockSpec(b4.shape, rep_map),
            ],
            out_specs=pl.BlockSpec((tile, out_dim), x_map),
        ),
        compiler_params=pltpu.CompilerParams(
            dimension_semantics=("parallel",),
            vmem_limit_bytes=32 * 1024 * 1024),
        cost_estimate=pl.CostEstimate(
            flops=flops, transcendentals=0, bytes_accessed=bytes_accessed),
    )(x, w1, b1, w2, b2, w3, b3, w4, b4)


def init_params(key, input_size, output_size):
    """Deterministic init matching nn.Linear's U(-1/sqrt(fan_in), 1/sqrt(fan_in))."""
    dims = [(input_size, HIDDEN_1), (HIDDEN_1, HIDDEN_2),
            (HIDDEN_2, HIDDEN_3), (HIDDEN_3, output_size)]
    params = {}
    for idx, (fan_in, fan_out) in enumerate(dims, start=1):
        key, kw, kb = jax.random.split(key, 3)
        bound = 1.0 / math.sqrt(fan_in)
        # Stored as [in, out] (transpose of PyTorch's weight layout).
        params[f"w{idx}"] = jax.random.uniform(
            kw, (fan_in, fan_out), jnp.float32, minval=-bound, maxval=bound)
        params[f"b{idx}"] = jax.random.uniform(
            kb, (1, fan_out), jnp.float32, minval=-bound, maxval=bound)
    return params


def reference_forward_bf16(x, params):
    """Reference matching the kernel's numerics (bf16 matmul inputs, f32 acc)."""
    bf = jnp.bfloat16
    h = jnp.dot(x.astype(bf), params["w1"].astype(bf),
                preferred_element_type=jnp.float32) + params["b1"]
    h = jnp.maximum(h, 0.0)
    h = jnp.dot(h.astype(bf), params["w2"].astype(bf),
                preferred_element_type=jnp.float32) + params["b2"]
    h = jnp.maximum(h, 0.0)
    h = jnp.dot(h.astype(bf), params["w3"].astype(bf),
                preferred_element_type=jnp.float32) + params["b3"]
    h = jnp.maximum(h, 0.0)
    return jnp.dot(h.astype(bf), params["w4"].astype(bf),
                   preferred_element_type=jnp.float32) + params["b4"]


if __name__ == "__main__":
    INPUT_SIZE = 32   # e.g. observation vector size
    OUTPUT_SIZE = 8   # e.g. number of actions

    key = jax.random.PRNGKey(0)
    key, kx1, kx2 = jax.random.split(key, 3)
    params = init_params(key, INPUT_SIZE, OUTPUT_SIZE)
    prepped = prepare_params(params)   # one-time bf16 weight prep

    # Case 1: tiny batch (grid collapses to a single step).
    x_small = jax.random.normal(kx1, (8, INPUT_SIZE), dtype=jnp.float32)
    fwd_small = jax.jit(functools.partial(network_forward, batch_tile=1024))
    y_small = fwd_small(x_small, prepped)
    jax.block_until_ready(y_small)
    assert y_small.shape == (8, OUTPUT_SIZE), y_small.shape
    ref_small = reference_forward_bf16(x_small, params)
    assert jnp.allclose(y_small, ref_small, atol=5e-3, rtol=5e-3), "mismatch (small batch)"

    # Case 2: non-divisible batch with >1 (even, balanced) grid blocks —
    # exercises Pallas boundary-block handling and the parallel batch grid.
    x_big = jax.random.normal(kx2, (300, INPUT_SIZE), dtype=jnp.float32)
    fwd_big = jax.jit(functools.partial(network_forward, batch_tile=128))
    y_big = fwd_big(x_big, prepped)
    jax.block_until_ready(y_big)
    assert y_big.shape == (300, OUTPUT_SIZE), y_big.shape
    ref_big = reference_forward_bf16(x_big, params)
    assert jnp.allclose(y_big, ref_big, atol=5e-3, rtol=5e-3), "mismatch (big batch)"

    print("KERNEL_OK")
</pallas_src>

<mosaic_0001>
module attributes {stable_mosaic.version = 11 : i64} {
  func.func @_mlp_kernel(%arg0: i32, %arg1: memref<8x32xf32, #tpu.memory_space<vmem>>, %arg2: memref<32x256xbf16, #tpu.memory_space<vmem>>, %arg3: memref<1x256xf32, #tpu.memory_space<vmem>>, %arg4: memref<256x256xbf16, #tpu.memory_space<vmem>>, %arg5: memref<1x256xf32, #tpu.memory_space<vmem>>, %arg6: memref<256x256xbf16, #tpu.memory_space<vmem>>, %arg7: memref<1x256xf32, #tpu.memory_space<vmem>>, %arg8: memref<256x8xbf16, #tpu.memory_space<vmem>>, %arg9: memref<1x8xf32, #tpu.memory_space<vmem>>, %arg10: memref<8x8xf32, #tpu.memory_space<vmem>>) attributes {dimension_semantics = [#tpu.dimension_semantics<parallel>], iteration_bounds = array<i64: 1>, scalar_prefetch = 0 : i64, scratch_operands = 0 : i64, tpu.core_type = #tpu.core_type<tc>, window_params = [{transform_indices = @transform_0, window_bounds = array<i64: 8, 32>}, {pipeline_mode = #tpu.pipeline_mode<synchronous>, transform_indices = @transform_1, window_bounds = array<i64: 32, 256>}, {pipeline_mode = #tpu.pipeline_mode<synchronous>, transform_indices = @transform_2, window_bounds = array<i64: 1, 256>}, {pipeline_mode = #tpu.pipeline_mode<synchronous>, transform_indices = @transform_3, window_bounds = array<i64: 256, 256>}, {pipeline_mode = #tpu.pipeline_mode<synchronous>, transform_indices = @transform_4, window_bounds = array<i64: 1, 256>}, {pipeline_mode = #tpu.pipeline_mode<synchronous>, transform_indices = @transform_5, window_bounds = array<i64: 256, 256>}, {pipeline_mode = #tpu.pipeline_mode<synchronous>, transform_indices = @transform_6, window_bounds = array<i64: 1, 256>}, {pipeline_mode = #tpu.pipeline_mode<synchronous>, transform_indices = @transform_7, window_bounds = array<i64: 256, 8>}, {pipeline_mode = #tpu.pipeline_mode<synchronous>, transform_indices = @transform_8, window_bounds = array<i64: 1, 8>}, {transform_indices = @transform_9, window_bounds = array<i64: 8, 8>}]} {
    %c0 = arith.constant 0 : index
    %c0_0 = arith.constant 0 : index
    %0 = vector.load %arg1[%c0, %c0_0] : memref<8x32xf32, #tpu.memory_space<vmem>>, vector<8x32xf32>
    %1 = arith.truncf %0 : vector<8x32xf32> to vector<8x32xbf16>
    %c0_1 = arith.constant 0 : index
    %c0_2 = arith.constant 0 : index
    %2 = vector.load %arg2[%c0_1, %c0_2] : memref<32x256xbf16, #tpu.memory_space<vmem>>, vector<32x256xbf16>
    %cst = arith.constant dense<0.000000e+00> : vector<8x256xf32>
    %3 = tpu.matmul %1, %2, %cst {dimension_numbers = #tpu.dot_dimension_numbers<[1], [0], [0], [1], [0, 0, 1, 1], [], []>} : vector<8x32xbf16>, vector<32x256xbf16>, vector<8x256xf32> -> vector<8x256xf32>
    %c0_3 = arith.constant 0 : index
    %c0_4 = arith.constant 0 : index
    %4 = vector.load %arg3[%c0_3, %c0_4] : memref<1x256xf32, #tpu.memory_space<vmem>>, vector<1x256xf32>
    %5 = vector.broadcast %4 : vector<1x256xf32> to vector<8x256xf32>
    %6 = arith.addf %3, %5 : vector<8x256xf32>
    %cst_5 = arith.constant 0.000000e+00 : f32
    %7 = vector.broadcast %cst_5 : f32 to vector<8x256xf32>
    %8 = arith.maximumf %6, %7 : vector<8x256xf32>
    %9 = arith.truncf %8 : vector<8x256xf32> to vector<8x256xbf16>
    %c0_6 = arith.constant 0 : index
    %c0_7 = arith.constant 0 : index
    %10 = vector.load %arg4[%c0_6, %c0_7] : memref<256x256xbf16, #tpu.memory_space<vmem>>, vector<256x256xbf16>
    %cst_8 = arith.constant dense<0.000000e+00> : vector<8x256xf32>
    %11 = tpu.matmul %9, %10, %cst_8 {dimension_numbers = #tpu.dot_dimension_numbers<[1], [0], [0], [1], [0, 0, 1, 1], [], []>} : vector<8x256xbf16>, vector<256x256xbf16>, vector<8x256xf32> -> vector<8x256xf32>
    %c0_9 = arith.constant 0 : index
    %c0_10 = arith.constant 0 : index
    %12 = vector.load %arg5[%c0_9, %c0_10] : memref<1x256xf32, #tpu.memory_space<vmem>>, vector<1x256xf32>
    %13 = vector.broadcast %12 : vector<1x256xf32> to vector<8x256xf32>
    %14 = arith.addf %11, %13 : vector<8x256xf32>
    %cst_11 = arith.constant 0.000000e+00 : f32
    %15 = vector.broadcast %cst_11 : f32 to vector<8x256xf32>
    %16 = arith.maximumf %14, %15 : vector<8x256xf32>
    %17 = arith.truncf %16 : vector<8x256xf32> to vector<8x256xbf16>
    %c0_12 = arith.constant 0 : index
    %c0_13 = arith.constant 0 : index
    %18 = vector.load %arg6[%c0_12, %c0_13] : memref<256x256xbf16, #tpu.memory_space<vmem>>, vector<256x256xbf16>
    %cst_14 = arith.constant dense<0.000000e+00> : vector<8x256xf32>
    %19 = tpu.matmul %17, %18, %cst_14 {dimension_numbers = #tpu.dot_dimension_numbers<[1], [0], [0], [1], [0, 0, 1, 1], [], []>} : vector<8x256xbf16>, vector<256x256xbf16>, vector<8x256xf32> -> vector<8x256xf32>
    %c0_15 = arith.constant 0 : index
    %c0_16 = arith.constant 0 : index
    %20 = vector.load %arg7[%c0_15, %c0_16] : memref<1x256xf32, #tpu.memory_space<vmem>>, vector<1x256xf32>
    %21 = vector.broadcast %20 : vector<1x256xf32> to vector<8x256xf32>
    %22 = arith.addf %19, %21 : vector<8x256xf32>
    %cst_17 = arith.constant 0.000000e+00 : f32
    %23 = vector.broadcast %cst_17 : f32 to vector<8x256xf32>
    %24 = arith.maximumf %22, %23 : vector<8x256xf32>
    %25 = arith.truncf %24 : vector<8x256xf32> to vector<8x256xbf16>
    %c0_18 = arith.constant 0 : index
    %c0_19 = arith.constant 0 : index
    %26 = vector.load %arg8[%c0_18, %c0_19] : memref<256x8xbf16, #tpu.memory_space<vmem>>, vector<256x8xbf16>
    %cst_20 = arith.constant dense<0.000000e+00> : vector<8x8xf32>
    %27 = tpu.matmul %25, %26, %cst_20 {dimension_numbers = #tpu.dot_dimension_numbers<[1], [0], [0], [1], [0, 0, 1, 1], [], []>} : vector<8x256xbf16>, vector<256x8xbf16>, vector<8x8xf32> -> vector<8x8xf32>
    %c0_21 = arith.constant 0 : index
    %c0_22 = arith.constant 0 : index
    %28 = vector.load %arg9[%c0_21, %c0_22] : memref<1x8xf32, #tpu.memory_space<vmem>>, vector<1x8xf32>
    %29 = vector.broadcast %28 : vector<1x8xf32> to vector<8x8xf32>
    %30 = arith.addf %27, %29 : vector<8x8xf32>
    %c0_23 = arith.constant 0 : index
    %c0_24 = arith.constant 0 : index
    %31 = vector.load %arg10[%c0_23, %c0_24] : memref<8x8xf32, #tpu.memory_space<vmem>>, vector<8x8xf32>
    tpu.vector_store %arg10[%c0_23, %c0_24], %30 {strides = array<i32>} : memref<8x8xf32, #tpu.memory_space<vmem>>, vector<8x8xf32>,
    return
  }
  func.func @transform_0(%arg0: i32) -> (i32, i32) {
    %c0_i32 = arith.constant 0 : i32
    %c0_i32_0 = arith.constant 0 : i32
    return %arg0, %c0_i32 : i32, i32
  }
  func.func @transform_1(%arg0: i32) -> (i32, i32) {
    %c0_i32 = arith.constant 0 : i32
    %c0_i32_0 = arith.constant 0 : i32
    %c0_i32_1 = arith.constant 0 : i32
    return %c0_i32, %c0_i32_0 : i32, i32
  }
  func.func @transform_2(%arg0: i32) -> (i32, i32) {
    %c0_i32 = arith.constant 0 : i32
    %c0_i32_0 = arith.constant 0 : i32
    %c0_i32_1 = arith.constant 0 : i32
    return %c0_i32, %c0_i32_0 : i32, i32
  }
  func.func @transform_3(%arg0: i32) -> (i32, i32) {
    %c0_i32 = arith.constant 0 : i32
    %c0_i32_0 = arith.constant 0 : i32
    %c0_i32_1 = arith.constant 0 : i32
    return %c0_i32, %c0_i32_0 : i32, i32
  }
  func.func @transform_4(%arg0: i32) -> (i32, i32) {
    %c0_i32 = arith.constant 0 : i32
    %c0_i32_0 = arith.constant 0 : i32
    %c0_i32_1 = arith.constant 0 : i32
    return %c0_i32, %c0_i32_0 : i32, i32
  }
  func.func @transform_5(%arg0: i32) -> (i32, i32) {
    %c0_i32 = arith.constant 0 : i32
    %c0_i32_0 = arith.constant 0 : i32
    %c0_i32_1 = arith.constant 0 : i32
    return %c0_i32, %c0_i32_0 : i32, i32
  }
  func.func @transform_6(%arg0: i32) -> (i32, i32) {
    %c0_i32 = arith.constant 0 : i32
    %c0_i32_0 = arith.constant 0 : i32
    %c0_i32_1 = arith.constant 0 : i32
    return %c0_i32, %c0_i32_0 : i32, i32
  }
  func.func @transform_7(%arg0: i32) -> (i32, i32) {
    %c0_i32 = arith.constant 0 : i32
    %c0_i32_0 = arith.constant 0 : i32
    %c0_i32_1 = arith.constant 0 : i32
    return %c0_i32, %c0_i32_0 : i32, i32
  }
  func.func @transform_8(%arg0: i32) -> (i32, i32) {
    %c0_i32 = arith.constant 0 : i32
    %c0_i32_0 = arith.constant 0 : i32
    %c0_i32_1 = arith.constant 0 : i32
    return %c0_i32, %c0_i32_0 : i32, i32
  }
  func.func @transform_9(%arg0: i32) -> (i32, i32) {
    %c0_i32 = arith.constant 0 : i32
    %c0_i32_0 = arith.constant 0 : i32
    return %arg0, %c0_i32 : i32, i32
  }
}

</mosaic_0001>

<llo_original>
// kernel: network_forward.1
$region0: #{network_forward.1}
  #allocation0 [shape = 'u32[]', space=smem, size = 0x4, offset = 0x4, fixed_abs, tag = 'smem constant byte address 0x4 - core index']
  #allocation1 [shape = 'u32[144,128]{1,0:T(1,128)}', space=vmem, size = 0x12000, scoped, tag = 'internal scratch']
  %s0 = inlined_call_operand.vmem [shape: f32[8,32], index: 0, kind: input, shape index: {}]
  %s1 = inlined_call_operand.vmem [shape: bf16[32,256], index: 1, kind: input, shape index: {}]
  %s2 = inlined_call_operand.vmem [shape: f32[1,256], index: 2, kind: input, shape index: {}]
  %s3 = inlined_call_operand.hbm [shape: bf16[256,256], index: 3, kind: input, shape index: {}]
  %s4 = inlined_call_operand.vmem [shape: f32[1,256], index: 4, kind: input, shape index: {}]
  %s5 = inlined_call_operand.hbm [shape: bf16[256,256], index: 5, kind: input, shape index: {}]
  %s6 = inlined_call_operand.vmem [shape: f32[1,256], index: 6, kind: input, shape index: {}]
  %s7 = inlined_call_operand.vmem [shape: bf16[256,8], index: 7, kind: input, shape index: {}]
  %s8 = inlined_call_operand.vmem [shape: f32[1,8], index: 8, kind: input, shape index: {}]
  %s9 = inlined_call_operand.hbm [shape: f32[8,8], index: 9, kind: output, shape index: {}]
  %s10 = sld [smem:[#allocation0]]
  $region54: #{network_forward.1} parent=0
    _
  %s12 = ssub.s32 1, %s10
  %s13 = scalar_select 0, %s12, %s10
  $region1: #{network_forward.1} parent=0
    #allocation2 [shape = 'u8[131072]{0}', space=vmem, size = 0x20000, scoped, tag = 'input window, operand 3, single buffered']
    #allocation3 [shape = 's32[1]{0}', space=sflag, size = 0x4, scoped, tag = 'scoped memory for network_forward.1']
    #allocation4 [shape = 's32[1]{0}', space=sflag, size = 0x4, scoped, tag = 'scoped memory for network_forward.1']
    #allocation5 [shape = 'u8[131072]{0}', space=vmem, size = 0x20000, scoped, tag = 'input window, operand 5, single buffered']
    #allocation6 [shape = 's32[1]{0}', space=sflag, size = 0x4, scoped, tag = 'scoped memory for network_forward.1']
    #allocation7 [shape = 'u8[4096]{0}', space=vmem, size = 0x1000, scoped, tag = 'output window, operand 0, single buffered']
    %14 = vsyncpa [#allocation3], 0
    %15 = vsyncpa [#allocation6], 0
    %16 = vsyncpa [#allocation4], 0
    // Predicated region
    $region2: #{network_forward.1} parent=1 // pred_check
      _
    $region3: #{network_forward.1} parent=1 // pred_check_branch
      %18 = sbr.rel (0) target = $region5
    $region4: #{network_forward.1} parent=1 // pred_region
      _
    $region5: #{network_forward.1} parent=1 // pred_fallthru
      _
    // Predicated region
    $region6: #{network_forward.1} parent=1 // pred_check
      _
    $region7: #{network_forward.1} parent=1 // pred_check_branch
      %20 = sbr.rel (0) target = $region9
    $region8: #{network_forward.1} parent=1 // pred_region
      _
    $region9: #{network_forward.1} parent=1 // pred_fallthru
      _
    // Predicated region
    $region10: #{network_forward.1} parent=1 // pred_check
      _
    $region11: #{network_forward.1} parent=1 // pred_check_branch
      %22 = sbr.rel (0) target = $region13
    $region12: #{network_forward.1} parent=1 // pred_region
      _
    $region13: #{network_forward.1} parent=1 // pred_fallthru
      _
    // Predicated region
    $region14: #{network_forward.1} parent=1 // pred_check
      _
    $region15: #{network_forward.1} parent=1 // pred_check_branch
      %24 = sbr.rel (0) target = $region17
    $region16: #{network_forward.1} parent=1 // pred_region
      %s26 = ssub.s32 4096, 4096
      %27 = vsyncadd [#allocation3], %s26
      %s28 = sshll.u32 [#allocation2], 4
      %s29 = int_to_ptr.vmem [resolvable:$true] %s28
      %34 = dma.hbm_to_vmem [thread:$0]  %s3, 4096, %s29, [#allocation3], 128, 128, 8
    $region17: #{network_forward.1} parent=1 // pred_fallthru
      _
    // Predicated region
    $region18: #{network_forward.1} parent=1 // pred_check
      _
    $region19: #{network_forward.1} parent=1 // pred_check_branch
      %36 = sbr.rel (0) target = $region21
    $region20: #{network_forward.1} parent=1 // pred_region
      _
    $region21: #{network_forward.1} parent=1 // pred_fallthru
      _
    // Predicated region
    $region22: #{network_forward.1} parent=1 // pred_check
      _
    $region23: #{network_forward.1} parent=1 // pred_check_branch
      %38 = sbr.rel (0) target = $region25
    $region24: #{network_forward.1} parent=1 // pred_region
      %s40 = ssub.s32 4096, 4096
      %41 = vsyncadd [#allocation6], %s40
      %s42 = sshll.u32 [#allocation5], 4
      %s43 = int_to_ptr.vmem [resolvable:$true] %s42
      %48 = dma.hbm_to_vmem [thread:$0]  %s5, 4096, %s43, [#allocation6], 128, 128, 8
    $region25: #{network_forward.1} parent=1 // pred_fallthru
      _
    // Predicated region
    $region26: #{network_forward.1} parent=1 // pred_check
      _
    $region27: #{network_forward.1} parent=1 // pred_check_branch
      %50 = sbr.rel (0) target = $region29
    $region28: #{network_forward.1} parent=1 // pred_region
      _
    $region29: #{network_forward.1} parent=1 // pred_fallthru
      _
    // Predicated region
    $region30: #{network_forward.1} parent=1 // pred_check
      _
    $region31: #{network_forward.1} parent=1 // pred_check_branch
      %52 = sbr.rel (0) target = $region33
    $region32: #{network_forward.1} parent=1 // pred_region
      _
    $region33: #{network_forward.1} parent=1 // pred_fallthru
      _
    // Predicated region
    $region34: #{network_forward.1} parent=1 // pred_check
      _
    $region35: #{network_forward.1} parent=1 // pred_check_branch
      %54 = sbr.rel (0) target = $region37
    $region36: #{network_forward.1} parent=1 // pred_region
      _
    $region37: #{network_forward.1} parent=1 // pred_fallthru
      _
    // Predicated region
    $region38: #{network_forward.1} parent=1 // pred_check
      _
    $region39: #{network_forward.1} parent=1 // pred_check_branch
      %56 = sbr.rel (0) target = $region41
    $region40: #{network_forward.1} parent=1 // pred_region
      %57 = dma.done [#allocation3], 4096
    $region41: #{network_forward.1} parent=1 // pred_fallthru
      _
    // Predicated region
    $region42: #{network_forward.1} parent=1 // pred_check
      _
    $region43: #{network_forward.1} parent=1 // pred_check_branch
      %59 = sbr.rel (0) target = $region45
    $region44: #{network_forward.1} parent=1 // pred_region
      %60 = dma.done [#allocation6], 4096
    $region45: #{network_forward.1} parent=1 // pred_fallthru
      _
    %v62 = vld [vmem:[%s0] sm:$0xff]
    %v63 = vpack.c.bf16 %v62, %v62
    %v64 = vld [vmem:[%s1] sm:$0xff]
    %v65 = vld [vmem:[%s1 + $0x8] sm:$0xff]
    %v66 = vld [vmem:[%s1 + $0x10] sm:$0xff]
    %v67 = vld [vmem:[%s1 + $0x18] sm:$0xff]
    %v68 = vld [vmem:[%s2] sm:$0x3]
    %v70 = vlaneseq
    %v71 = vshrl.u32 %v70, 7
    %v72 = vsub.s32 0, %v71
    %v73 = vrot.slane %v68, %v72
    %v74 = vlaneseq
    %v75 = vshrl.u32 %v74, 7
    %v76 = vsub.s32 1, %v75
    %v77 = vrot.slane %v68, %v76
    %v84 = vunpack.c.l.b16 %v64
    %v85 = vunpack.c.h.b16 %v64
    %v86 = vunpack.c.l.b16 %v65
    %v87 = vunpack.c.h.b16 %v65
    %v88 = vunpack.c.l.b16 %v66
    %v89 = vunpack.c.h.b16 %v66
    %v90 = vunpack.c.l.b16 %v67
    %v91 = vunpack.c.h.b16 %v67
    %v92 = vpack.c.b16 %v86, %v84
    %v93 = vpack.c.b16 %v87, %v85
    %v94 = vpack.c.b16 %v90, %v88
    %v95 = vpack.c.b16 %v91, %v89
    %vm100 = vcmask 261120
    %v102 = vsel %vm100, %v63, 0
    %104 = vmatprep.subr.bf16.mxu0 0
    %105 = vmatpush1.bf16.msra.mxu0 0
    %106 = vmatprep.subr.bf16.mxu0 0
    %107 = vmatpush1.bf16.msra.mxu0 0
    %108 = vmatprep.subr.bf16.mxu0 0
    %109 = vmatpush1.bf16.msra.mxu0 0
    %110 = vmatprep.subr.bf16.mxu0 0
    %111 = vmatpush1.bf16.msra.mxu0 0
    %112 = vmatprep.subr.bf16.mxu0 0
    %113 = vmatpush1.bf16.msra.mxu0 0
    %114 = vmatprep.subr.bf16.mxu0 0
    %115 = vmatpush1.bf16.msra.mxu0 0
    %116 = vmatprep.subr.bf16.mxu0 %v95
    %117 = vmatpush1.bf16.msra.mxu0 %v94
    %118 = vmatprep.subr.bf16.mxu0 %v93
    %119 = vmatpush1.bf16.msra.mxu0 %v92
    %120 = vmatprep.subr.bf16.mxu0 0
    %121 = vmatpush2.bf16.msra.mxu0 0
    %122 = vmatprep.subr.bf16.mxu0 0
    %123 = vmatpush2.bf16.msra.mxu0 0
    %124 = vmatprep.subr.bf16.mxu0 0
    %125 = vmatpush2.bf16.msra.mxu0 0
    %126 = vmatprep.subr.bf16.mxu0 0
    %127 = vmatpush2.bf16.msra.mxu0 0
    %128 = vmatprep.subr.bf16.mxu0 0
    %129 = vmatpush2.bf16.msra.mxu0 0
    %130 = vmatprep.subr.bf16.mxu0 0
    %131 = vmatpush2.bf16.msra.mxu0 0
    %132 = vmatprep.subr.bf16.mxu0 0
    %133 = vmatpush2.bf16.msra.mxu0 0
    %134 = vmatprep.subr.bf16.mxu0 0
    %135 = vmatpush2.bf16.msra.mxu0 0
    %136 = vmatprep.mubr.bf16.mxu0 0
    %137 = vmatmul.mubr.bf16.gmra.mxu0 %v102
    %v138 = vpop.f32.mrf.mxu0
    %v139 = vadd.f32 %v73, %v138
    %v140 = vpop.f32.mrf.mxu0
    %v141 = vadd.f32 %v77, %v140
    %v142 = vpop.f32.mrf.mxu0
    %v143 = vpop.f32.mrf.mxu0
    %144 = vdwg.mxu0
    %v145 = vmax.f32 %v139, 0.0
    %v146 = vmax.f32 %v141, 0.0
    %v147 = vpack.c.bf16 %v145, %v145
    %v148 = vpack.c.bf16 %v146, %v146
    %v149 = vld [vmem:[#allocation2] sm:$0xff]
    %v150 = vld [vmem:[#allocation2 + $0x8] sm:$0xff]
    %v151 = vld [vmem:[#allocation2 + $0x10] sm:$0xff]
    %v152 = vld [vmem:[#allocation2 + $0x18] sm:$0xff]
    %v153 = vld [vmem:[#allocation2 + $0x20] sm:$0xff]
    %v154 = vld [vmem:[#allocation2 + $0x28] sm:$0xff]
    %v155 = vld [vmem:[#allocation2 + $0x30] sm:$0xff]
    %v156 = vld [vmem:[#allocation2 + $0x38] sm:$0xff]
    %v157 = vld [vmem:[#allocation2 + $0x40] sm:$0xff]
    %v158 = vld [vmem:[#allocation2 + $0x48] sm:$0xff]
    %v159 = vld [vmem:[#allocation2 + $0x50] sm:$0xff]
    %v160 = vld [vmem:[#allocation2 + $0x58] sm:$0xff]
    %v161 = vld [vmem:[#allocation2 + $0x60] sm:$0xff]
    %v162 = vld [vmem:[#allocation2 + $0x68] sm:$0xff]
    %v163 = vld [vmem:[#allocation2 + $0x70] sm:$0xff]
    %v164 = vld [vmem:[#allocation2 + $0x78] sm:$0xff]
    %v165 = vld [vmem:[#allocation2 + $0x80] sm:$0xff]
    %v166 = vld [vmem:[#allocation2 + $0x88] sm:$0xff]
    %v167 = vld [vmem:[#allocation2 + $0x90] sm:$0xff]
    %v168 = vld [vmem:[#allocation2 + $0x98] sm:$0xff]
    %v169 = vld [vmem:[#allocation2 + $0xa0] sm:$0xff]
    %v170 = vld [vmem:[#allocation2 + $0xa8] sm:$0xff]
    %v171 = vld [vmem:[#allocation2 + $0xb0] sm:$0xff]
    %v172 = vld [vmem:[#allocation2 + $0xb8] sm:$0xff]
    %v173 = vld [vmem:[#allocation2 + $0xc0] sm:$0xff]
    %v174 = vld [vmem:[#allocation2 + $0xc8] sm:$0xff]
    %v175 = vld [vmem:[#allocation2 + $0xd0] sm:$0xff]
    %v176 = vld [vmem:[#allocation2 + $0xd8] sm:$0xff]
    %v177 = vld [vmem:[#allocation2 + $0xe0] sm:$0xff]
    %v178 = vld [vmem:[#allocation2 + $0xe8] sm:$0xff]
    %v179 = vld [vmem:[#allocation2 + $0xf0] sm:$0xff]
    %v180 = vld [vmem:[#allocation2 + $0xf8] sm:$0xff]
    %v181 = vld [vmem:[%s4] sm:$0x3]
    %v183 = vlaneseq
    %v184 = vshrl.u32 %v183, 7
    %v185 = vsub.s32 0, %v184
    %v186 = vrot.slane %v181, %v185
    %v187 = vlaneseq
    %v188 = vshrl.u32 %v187, 7
    %v189 = vsub.s32 1, %v188
    %v190 = vrot.slane %v181, %v189
    %v225 = vunpack.c.l.b16 %v149
    %v226 = vunpack.c.h.b16 %v149
    %v227 = vunpack.c.l.b16 %v150
    %v228 = vunpack.c.h.b16 %v150
    %v229 = vunpack.c.l.b16 %v151
    %v230 = vunpack.c.h.b16 %v151
    %v231 = vunpack.c.l.b16 %v152
    %v232 = vunpack.c.h.b16 %v152
    %v233 = vunpack.c.l.b16 %v153
    %v234 = vunpack.c.h.b16 %v153
    %v235 = vunpack.c.l.b16 %v154
    %v236 = vunpack.c.h.b16 %v154
    %v237 = vunpack.c.l.b16 %v155
    %v238 = vunpack.c.h.b16 %v155
    %v239 = vunpack.c.l.b16 %v156
    %v240 = vunpack.c.h.b16 %v156
    %v241 = vunpack.c.l.b16 %v157
    %v242 = vunpack.c.h.b16 %v157
    %v243 = vunpack.c.l.b16 %v158
    %v244 = vunpack.c.h.b16 %v158
    %v245 = vunpack.c.l.b16 %v159
    %v246 = vunpack.c.h.b16 %v159
    %v247 = vunpack.c.l.b16 %v160
    %v248 = vunpack.c.h.b16 %v160
    %v249 = vunpack.c.l.b16 %v161
    %v250 = vunpack.c.h.b16 %v161
    %v251 = vunpack.c.l.b16 %v162
    %v252 = vunpack.c.h.b16 %v162
    %v253 = vunpack.c.l.b16 %v163
    %v254 = vunpack.c.h.b16 %v163
    %v255 = vunpack.c.l.b16 %v164
    %v256 = vunpack.c.h.b16 %v164
    %v257 = vunpack.c.l.b16 %v165
    %v258 = vunpack.c.h.b16 %v165
    %v259 = vunpack.c.l.b16 %v166
    %v260 = vunpack.c.h.b16 %v166
    %v261 = vunpack.c.l.b16 %v167
    %v262 = vunpack.c.h.b16 %v167
    %v263 = vunpack.c.l.b16 %v168
    %v264 = vunpack.c.h.b16 %v168
    %v265 = vunpack.c.l.b16 %v169
    %v266 = vunpack.c.h.b16 %v169
    %v267 = vunpack.c.l.b16 %v170
    %v268 = vunpack.c.h.b16 %v170
    %v269 = vunpack.c.l.b16 %v171
    %v270 = vunpack.c.h.b16 %v171
    %v271 = vunpack.c.l.b16 %v172
    %v272 = vunpack.c.h.b16 %v172
    %v273 = vunpack.c.l.b16 %v173
    %v274 = vunpack.c.h.b16 %v173
    %v275 = vunpack.c.l.b16 %v174
    %v276 = vunpack.c.h.b16 %v174
    %v277 = vunpack.c.l.b16 %v175
    %v278 = vunpack.c.h.b16 %v175
    %v279 = vunpack.c.l.b16 %v176
    %v280 = vunpack.c.h.b16 %v176
    %v281 = vunpack.c.l.b16 %v177
    %v282 = vunpack.c.h.b16 %v177
    %v283 = vunpack.c.l.b16 %v178
    %v284 = vunpack.c.h.b16 %v178
    %v285 = vunpack.c.l.b16 %v179
    %v286 = vunpack.c.h.b16 %v179
    %v287 = vunpack.c.l.b16 %v180
    %v288 = vunpack.c.h.b16 %v180
    %v289 = vpack.c.b16 %v227, %v225
    %v290 = vpack.c.b16 %v228, %v226
    %v291 = vpack.c.b16 %v231, %v229
    %v292 = vpack.c.b16 %v232, %v230
    %v293 = vpack.c.b16 %v235, %v233
    %v294 = vpack.c.b16 %v236, %v234
    %v295 = vpack.c.b16 %v239, %v237
    %v296 = vpack.c.b16 %v240, %v238
    %v297 = vpack.c.b16 %v243, %v241
    %v298 = vpack.c.b16 %v244, %v242
    %v299 = vpack.c.b16 %v247, %v245
    %v300 = vpack.c.b16 %v248, %v246
    %v301 = vpack.c.b16 %v251, %v249
    %v302 = vpack.c.b16 %v252, %v250
    %v303 = vpack.c.b16 %v255, %v253
    %v304 = vpack.c.b16 %v256, %v254
    %v305 = vpack.c.b16 %v259, %v257
    %v306 = vpack.c.b16 %v260, %v258
    %v307 = vpack.c.b16 %v263, %v261
    %v308 = vpack.c.b16 %v264, %v262
    %v309 = vpack.c.b16 %v267, %v265
    %v310 = vpack.c.b16 %v268, %v266
    %v311 = vpack.c.b16 %v271, %v269
    %v312 = vpack.c.b16 %v272, %v270
    %v313 = vpack.c.b16 %v275, %v273
    %v314 = vpack.c.b16 %v276, %v274
    %v315 = vpack.c.b16 %v279, %v277
    %v316 = vpack.c.b16 %v280, %v278
    %v317 = vpack.c.b16 %v283, %v281
    %v318 = vpack.c.b16 %v284, %v282
    %v319 = vpack.c.b16 %v287, %v285
    %v320 = vpack.c.b16 %v288, %v286
    %353 = vmatprep.subr.bf16.mxu0 %v304
    %354 = vmatpush1.bf16.msra.mxu0 %v303
    %355 = vmatprep.subr.bf16.mxu0 %v302
    %356 = vmatpush1.bf16.msra.mxu0 %v301
    %357 = vmatprep.subr.bf16.mxu0 %v300
    %358 = vmatpush1.bf16.msra.mxu0 %v299
    %359 = vmatprep.subr.bf16.mxu0 %v298
    %360 = vmatpush1.bf16.msra.mxu0 %v297
    %361 = vmatprep.subr.bf16.mxu0 %v296
    %362 = vmatpush1.bf16.msra.mxu0 %v295
    %363 = vmatprep.subr.bf16.mxu0 %v294
    %364 = vmatpush1.bf16.msra.mxu0 %v293
    %365 = vmatprep.subr.bf16.mxu0 %v292
    %366 = vmatpush1.bf16.msra.mxu0 %v291
    %367 = vmatprep.subr.bf16.mxu0 %v290
    %368 = vmatpush1.bf16.msra.mxu0 %v289
    %369 = vmatprep.subr.bf16.mxu0 %v320
    %370 = vmatpush2.bf16.msra.mxu0 %v319
    %371 = vmatprep.subr.bf16.mxu0 %v318
    %372 = vmatpush2.bf16.msra.mxu0 %v317
    %373 = vmatprep.subr.bf16.mxu0 %v316
    %374 = vmatpush2.bf16.msra.mxu0 %v315
    %375 = vmatprep.subr.bf16.mxu0 %v314
    %376 = vmatpush2.bf16.msra.mxu0 %v313
    %377 = vmatprep.subr.bf16.mxu0 %v312
    %378 = vmatpush2.bf16.msra.mxu0 %v311
    %379 = vmatprep.subr.bf16.mxu0 %v310
    %380 = vmatpush2.bf16.msra.mxu0 %v309
    %381 = vmatprep.subr.bf16.mxu0 %v308
    %382 = vmatpush2.bf16.msra.mxu0 %v307
    %383 = vmatprep.subr.bf16.mxu0 %v306
    %384 = vmatpush2.bf16.msra.mxu0 %v305
    %385 = vmatprep.mubr.bf16.mxu0 %v148
    %386 = vmatmul.mubr.bf16.gmra.mxu0 %v147
    %v387 = vpop.f32.mrf.mxu0
    %v388 = vadd.f32 %v186, %v387
    %v389 = vpop.f32.mrf.mxu0
    %v390 = vadd.f32 %v190, %v389
    %v391 = vpop.f32.mrf.mxu0
    %v392 = vpop.f32.mrf.mxu0
    %393 = vdwg.mxu0
    %v394 = vmax.f32 %v388, 0.0
    %v395 = vmax.f32 %v390, 0.0
    %v396 = vpack.c.bf16 %v394, %v394
    %v397 = vpack.c.bf16 %v395, %v395
    %v398 = vld [vmem:[#allocation5] sm:$0xff]
    %v399 = vld [vmem:[#allocation5 + $0x8] sm:$0xff]
    %v400 = vld [vmem:[#allocation5 + $0x10] sm:$0xff]
    %v401 = vld [vmem:[#allocation5 + $0x18] sm:$0xff]
    %v402 = vld [vmem:[#allocation5 + $0x20] sm:$0xff]
    %v403 = vld [vmem:[#allocation5 + $0x28] sm:$0xff]
    %v404 = vld [vmem:[#allocation5 + $0x30] sm:$0xff]
    %v405 = vld [vmem:[#allocation5 + $0x38] sm:$0xff]
    %v406 = vld [vmem:[#allocation5 + $0x40] sm:$0xff]
    %v407 = vld [vmem:[#allocation5 + $0x48] sm:$0xff]
    %v408 = vld [vmem:[#allocation5 + $0x50] sm:$0xff]
    %v409 = vld [vmem:[#allocation5 + $0x58] sm:$0xff]
    %v410 = vld [vmem:[#allocation5 + $0x60] sm:$0xff]
    %v411 = vld [vmem:[#allocation5 + $0x68] sm:$0xff]
    %v412 = vld [vmem:[#allocation5 + $0x70] sm:$0xff]
    %v413 = vld [vmem:[#allocation5 + $0x78] sm:$0xff]
    %v414 = vld [vmem:[#allocation5 + $0x80] sm:$0xff]
    %v415 = vld [vmem:[#allocation5 + $0x88] sm:$0xff]
    %v416 = vld [vmem:[#allocation5 + $0x90] sm:$0xff]
    %v417 = vld [vmem:[#allocation5 + $0x98] sm:$0xff]
    %v418 = vld [vmem:[#allocation5 + $0xa0] sm:$0xff]
    %v419 = vld [vmem:[#allocation5 + $0xa8] sm:$0xff]
    %v420 = vld [vmem:[#allocation5 + $0xb0] sm:$0xff]
    %v421 = vld [vmem:[#allocation5 + $0xb8] sm:$0xff]
    %v422 = vld [vmem:[#allocation5 + $0xc0] sm:$0xff]
    %v423 = vld [vmem:[#allocation5 + $0xc8] sm:$0xff]
    %v424 = vld [vmem:[#allocation5 + $0xd0] sm:$0xff]
    %v425 = vld [vmem:[#allocation5 + $0xd8] sm:$0xff]
    %v426 = vld [vmem:[#allocation5 + $0xe0] sm:$0xff]
    %v427 = vld [vmem:[#allocation5 + $0xe8] sm:$0xff]
    %v428 = vld [vmem:[#allocation5 + $0xf0] sm:$0xff]
    %v429 = vld [vmem:[#allocation5 + $0xf8] sm:$0xff]
    %v430 = vld [vmem:[%s6] sm:$0x3]
    %v432 = vlaneseq
    %v433 = vshrl.u32 %v432, 7
    %v434 = vsub.s32 0, %v433
    %v435 = vrot.slane %v430, %v434
    %v436 = vlaneseq
    %v437 = vshrl.u32 %v436, 7
    %v438 = vsub.s32 1, %v437
    %v439 = vrot.slane %v430, %v438
    %v474 = vunpack.c.l.b16 %v398
    %v475 = vunpack.c.h.b16 %v398
    %v476 = vunpack.c.l.b16 %v399
    %v477 = vunpack.c.h.b16 %v399
    %v478 = vunpack.c.l.b16 %v400
    %v479 = vunpack.c.h.b16 %v400
    %v480 = vunpack.c.l.b16 %v401
    %v481 = vunpack.c.h.b16 %v401
    %v482 = vunpack.c.l.b16 %v402
    %v483 = vunpack.c.h.b16 %v402
    %v484 = vunpack.c.l.b16 %v403
    %v485 = vunpack.c.h.b16 %v403
    %v486 = vunpack.c.l.b16 %v404
    %v487 = vunpack.c.h.b16 %v404
    %v488 = vunpack.c.l.b16 %v405
    %v489 = vunpack.c.h.b16 %v405
    %v490 = vunpack.c.l.b16 %v406
    %v491 = vunpack.c.h.b16 %v406
    %v492 = vunpack.c.l.b16 %v407
    %v493 = vunpack.c.h.b16 %v407
    %v494 = vunpack.c.l.b16 %v408
    %v495 = vunpack.c.h.b16 %v408
    %v496 = vunpack.c.l.b16 %v409
    %v497 = vunpack.c.h.b16 %v409
    %v498 = vunpack.c.l.b16 %v410
    %v499 = vunpack.c.h.b16 %v410
    %v500 = vunpack.c.l.b16 %v411
    %v501 = vunpack.c.h.b16 %v411
    %v502 = vunpack.c.l.b16 %v412
    %v503 = vunpack.c.h.b16 %v412
    %v504 = vunpack.c.l.b16 %v413
    %v505 = vunpack.c.h.b16 %v413
    %v506 = vunpack.c.l.b16 %v414
    %v507 = vunpack.c.h.b16 %v414
    %v508 = vunpack.c.l.b16 %v415
    %v509 = vunpack.c.h.b16 %v415
    %v510 = vunpack.c.l.b16 %v416
    %v511 = vunpack.c.h.b16 %v416
    %v512 = vunpack.c.l.b16 %v417
    %v513 = vunpack.c.h.b16 %v417
    %v514 = vunpack.c.l.b16 %v418
    %v515 = vunpack.c.h.b16 %v418
    %v516 = vunpack.c.l.b16 %v419
    %v517 = vunpack.c.h.b16 %v419
    %v518 = vunpack.c.l.b16 %v420
    %v519 = vunpack.c.h.b16 %v420
    %v520 = vunpack.c.l.b16 %v421
    %v521 = vunpack.c.h.b16 %v421
    %v522 = vunpack.c.l.b16 %v422
    %v523 = vunpack.c.h.b16 %v422
    %v524 = vunpack.c.l.b16 %v423
    %v525 = vunpack.c.h.b16 %v423
    %v526 = vunpack.c.l.b16 %v424
    %v527 = vunpack.c.h.b16 %v424
    %v528 = vunpack.c.l.b16 %v425
    %v529 = vunpack.c.h.b16 %v425
    %v530 = vunpack.c.l.b16 %v426
    %v531 = vunpack.c.h.b16 %v426
    %v532 = vunpack.c.l.b16 %v427
    %v533 = vunpack.c.h.b16 %v427
    %v534 = vunpack.c.l.b16 %v428
    %v535 = vunpack.c.h.b16 %v428
    %v536 = vunpack.c.l.b16 %v429
    %v537 = vunpack.c.h.b16 %v429
    %v538 = vpack.c.b16 %v476, %v474
    %v539 = vpack.c.b16 %v477, %v475
    %v540 = vpack.c.b16 %v480, %v478
    %v541 = vpack.c.b16 %v481, %v479
    %v542 = vpack.c.b16 %v484, %v482
    %v543 = vpack.c.b16 %v485, %v483
    %v544 = vpack.c.b16 %v488, %v486
    %v545 = vpack.c.b16 %v489, %v487
    %v546 = vpack.c.b16 %v492, %v490
    %v547 = vpack.c.b16 %v493, %v491
    %v548 = vpack.c.b16 %v496, %v494
    %v549 = vpack.c.b16 %v497, %v495
    %v550 = vpack.c.b16 %v500, %v498
    %v551 = vpack.c.b16 %v501, %v499
    %v552 = vpack.c.b16 %v504, %v502
    %v553 = vpack.c.b16 %v505, %v503
    %v554 = vpack.c.b16 %v508, %v506
    %v555 = vpack.c.b16 %v509, %v507
    %v556 = vpack.c.b16 %v512, %v510
    %v557 = vpack.c.b16 %v513, %v511
    %v558 = vpack.c.b16 %v516, %v514
    %v559 = vpack.c.b16 %v517, %v515
    %v560 = vpack.c.b16 %v520, %v518
    %v561 = vpack.c.b16 %v521, %v519
    %v562 = vpack.c.b16 %v524, %v522
    %v563 = vpack.c.b16 %v525, %v523
    %v564 = vpack.c.b16 %v528, %v526
    %v565 = vpack.c.b16 %v529, %v527
    %v566 = vpack.c.b16 %v532, %v530
    %v567 = vpack.c.b16 %v533, %v531
    %v568 = vpack.c.b16 %v536, %v534
    %v569 = vpack.c.b16 %v537, %v535
    %602 = vmatprep.subr.bf16.mxu0 %v553
    %603 = vmatpush1.bf16.msra.mxu0 %v552
    %604 = vmatprep.subr.bf16.mxu0 %v551
    %605 = vmatpush1.bf16.msra.mxu0 %v550
    %606 = vmatprep.subr.bf16.mxu0 %v549
    %607 = vmatpush1.bf16.msra.mxu0 %v548
    %608 = vmatprep.subr.bf16.mxu0 %v547
    %609 = vmatpush1.bf16.msra.mxu0 %v546
    %610 = vmatprep.subr.bf16.mxu0 %v545
    %611 = vmatpush1.bf16.msra.mxu0 %v544
    %612 = vmatprep.subr.bf16.mxu0 %v543
    %613 = vmatpush1.bf16.msra.mxu0 %v542
    %614 = vmatprep.subr.bf16.mxu0 %v541
    %615 = vmatpush1.bf16.msra.mxu0 %v540
    %616 = vmatprep.subr.bf16.mxu0 %v539
    %617 = vmatpush1.bf16.msra.mxu0 %v538
    %618 = vmatprep.subr.bf16.mxu0 %v569
    %619 = vmatpush2.bf16.msra.mxu0 %v568
    %620 = vmatprep.subr.bf16.mxu0 %v567
    %621 = vmatpush2.bf16.msra.mxu0 %v566
    %622 = vmatprep.subr.bf16.mxu0 %v565
    %623 = vmatpush2.bf16.msra.mxu0 %v564
    %624 = vmatprep.subr.bf16.mxu0 %v563
    %625 = vmatpush2.bf16.msra.mxu0 %v562
    %626 = vmatprep.subr.bf16.mxu0 %v561
    %627 = vmatpush2.bf16.msra.mxu0 %v560
    %628 = vmatprep.subr.bf16.mxu0 %v559
    %629 = vmatpush2.bf16.msra.mxu0 %v558
    %630 = vmatprep.subr.bf16.mxu0 %v557
    %631 = vmatpush2.bf16.msra.mxu0 %v556
    %632 = vmatprep.subr.bf16.mxu0 %v555
    %633 = vmatpush2.bf16.msra.mxu0 %v554
    %634 = vmatprep.mubr.bf16.mxu0 %v397
    %635 = vmatmul.mubr.bf16.gmra.mxu0 %v396
    %v636 = vpop.f32.mrf.mxu0
    %v637 = vadd.f32 %v435, %v636
    %v638 = vpop.f32.mrf.mxu0
    %v639 = vadd.f32 %v439, %v638
    %v640 = vpop.f32.mrf.mxu0
    %v641 = vpop.f32.mrf.mxu0
    %642 = vdwg.mxu0
    %v643 = vmax.f32 %v637, 0.0
    %v644 = vmax.f32 %v639, 0.0
    %v645 = vpack.c.bf16 %v643, %v643
    %v646 = vpack.c.bf16 %v644, %v644
    %v647 = vld [vmem:[%s7] sm:$0xf]
    %v648 = vld [vmem:[%s7 + $0x4] sm:$0xf]
    %v649 = vld [vmem:[%s7 + $0x8] sm:$0xf]
    %v650 = vld [vmem:[%s7 + $0xc] sm:$0xf]
    %v651 = vld [vmem:[%s7 + $0x10] sm:$0xf]
    %v652 = vld [vmem:[%s7 + $0x14] sm:$0xf]
    %v653 = vld [vmem:[%s7 + $0x18] sm:$0xf]
    %v654 = vld [vmem:[%s7 + $0x1c] sm:$0xf]
    %v655 = vld [vmem:[%s7 + $0x20] sm:$0xf]
    %v656 = vld [vmem:[%s7 + $0x24] sm:$0xf]
    %v657 = vld [vmem:[%s7 + $0x28] sm:$0xf]
    %v658 = vld [vmem:[%s7 + $0x2c] sm:$0xf]
    %v659 = vld [vmem:[%s7 + $0x30] sm:$0xf]
    %v660 = vld [vmem:[%s7 + $0x34] sm:$0xf]
    %v661 = vld [vmem:[%s7 + $0x38] sm:$0xf]
    %v662 = vld [vmem:[%s7 + $0x3c] sm:$0xf]
    %v663 = vld [vmem:[%s7 + $0x40] sm:$0xf]
    %v664 = vld [vmem:[%s7 + $0x44] sm:$0xf]
    %v665 = vld [vmem:[%s7 + $0x48] sm:$0xf]
    %v666 = vld [vmem:[%s7 + $0x4c] sm:$0xf]
    %v667 = vld [vmem:[%s7 + $0x50] sm:$0xf]
    %v668 = vld [vmem:[%s7 + $0x54] sm:$0xf]
    %v669 = vld [vmem:[%s7 + $0x58] sm:$0xf]
    %v670 = vld [vmem:[%s7 + $0x5c] sm:$0xf]
    %v671 = vld [vmem:[%s7 + $0x60] sm:$0xf]
    %v672 = vld [vmem:[%s7 + $0x64] sm:$0xf]
    %v673 = vld [vmem:[%s7 + $0x68] sm:$0xf]
    %v674 = vld [vmem:[%s7 + $0x6c] sm:$0xf]
    %v675 = vld [vmem:[%s7 + $0x70] sm:$0xf]
    %v676 = vld [vmem:[%s7 + $0x74] sm:$0xf]
    %v677 = vld [vmem:[%s7 + $0x78] sm:$0xf]
    %v678 = vld [vmem:[%s7 + $0x7c] sm:$0xf]
    %v679 = vld [vmem:[%s8] sm:$0x1]
    %v681 = vlaneseq
    %v682 = vshrl.u32 %v681, 7
    %v683 = vsub.s32 0, %v682
    %v684 = vrot.slane %v679, %v683
    %v718 = vunpack.c.l.b16 %v647
    %v719 = vunpack.c.l.b16 %v648
    %v720 = vunpack.c.l.b16 %v649
    %v721 = vunpack.c.l.b16 %v650
    %v722 = vunpack.c.l.b16 %v651
    %v723 = vunpack.c.l.b16 %v652
    %v724 = vunpack.c.l.b16 %v653
    %v725 = vunpack.c.l.b16 %v654
    %v726 = vunpack.c.l.b16 %v655
    %v727 = vunpack.c.l.b16 %v656
    %v728 = vunpack.c.l.b16 %v657
    %v729 = vunpack.c.l.b16 %v658
    %v730 = vunpack.c.l.b16 %v659
    %v731 = vunpack.c.l.b16 %v660
    %v732 = vunpack.c.l.b16 %v661
    %v733 = vunpack.c.l.b16 %v662
    %v734 = vunpack.c.l.b16 %v663
    %v735 = vunpack.c.l.b16 %v664
    %v736 = vunpack.c.l.b16 %v665
    %v737 = vunpack.c.l.b16 %v666
    %v738 = vunpack.c.l.b16 %v667
    %v739 = vunpack.c.l.b16 %v668
    %v740 = vunpack.c.l.b16 %v669
    %v741 = vunpack.c.l.b16 %v670
    %v742 = vunpack.c.l.b16 %v671
    %v743 = vunpack.c.l.b16 %v672
    %v744 = vunpack.c.l.b16 %v673
    %v745 = vunpack.c.l.b16 %v674
    %v746 = vunpack.c.l.b16 %v675
    %v747 = vunpack.c.l.b16 %v676
    %v748 = vunpack.c.l.b16 %v677
    %v749 = vunpack.c.l.b16 %v678
    %v750 = vpack.c.b16 %v719, %v718
    %v751 = vpack.c.b16 %v721, %v720
    %v752 = vpack.c.b16 %v723, %v722
    %v753 = vpack.c.b16 %v725, %v724
    %v754 = vpack.c.b16 %v727, %v726
    %v755 = vpack.c.b16 %v729, %v728
    %v756 = vpack.c.b16 %v731, %v730
    %v757 = vpack.c.b16 %v733, %v732
    %v758 = vpack.c.b16 %v735, %v734
    %v759 = vpack.c.b16 %v737, %v736
    %v760 = vpack.c.b16 %v739, %v738
    %v761 = vpack.c.b16 %v741, %v740
    %v762 = vpack.c.b16 %v743, %v742
    %v763 = vpack.c.b16 %v745, %v744
    %v764 = vpack.c.b16 %v747, %v746
    %v765 = vpack.c.b16 %v749, %v748
    %782 = vmatprep.subr.bf16.mxu0 0
    %783 = vmatpush1.bf16.msra.mxu0 %v757
    %784 = vmatprep.subr.bf16.mxu0 0
    %785 = vmatpush1.bf16.msra.mxu0 %v756
    %786 = vmatprep.subr.bf16.mxu0 0
    %787 = vmatpush1.bf16.msra.mxu0 %v755
    %788 = vmatprep.subr.bf16.mxu0 0
    %789 = vmatpush1.bf16.msra.mxu0 %v754
    %790 = vmatprep.subr.bf16.mxu0 0
    %791 = vmatpush1.bf16.msra.mxu0 %v753
    %792 = vmatprep.subr.bf16.mxu0 0
    %793 = vmatpush1.bf16.msra.mxu0 %v752
    %794 = vmatprep.subr.bf16.mxu0 0
    %795 = vmatpush1.bf16.msra.mxu0 %v751
    %796 = vmatprep.subr.bf16.mxu0 0
    %797 = vmatpush1.bf16.msra.mxu0 %v750
    %798 = vmatprep.subr.bf16.mxu0 0
    %799 = vmatpush2.bf16.msra.mxu0 %v765
    %800 = vmatprep.subr.bf16.mxu0 0
    %801 = vmatpush2.bf16.msra.mxu0 %v764
    %802 = vmatprep.subr.bf16.mxu0 0
    %803 = vmatpush2.bf16.msra.mxu0 %v763
    %804 = vmatprep.subr.bf16.mxu0 0
    %805 = vmatpush2.bf16.msra.mxu0 %v762
    %806 = vmatprep.subr.bf16.mxu0 0
    %807 = vmatpush2.bf16.msra.mxu0 %v761
    %808 = vmatprep.subr.bf16.mxu0 0
    %809 = vmatpush2.bf16.msra.mxu0 %v760
    %810 = vmatprep.subr.bf16.mxu0 0
    %811 = vmatpush2.bf16.msra.mxu0 %v759
    %812 = vmatprep.subr.bf16.mxu0 0
    %813 = vmatpush2.bf16.msra.mxu0 %v758
    %814 = vmatprep.mubr.bf16.mxu0 %v646
    %815 = vmatmul.mubr.bf16.gmra.mxu0 %v645
    %v816 = vpop.f32.mrf.mxu0
    %v817 = vadd.f32 %v684, %v816
    %v818 = vpop.f32.mrf.mxu0
    %v819 = vpop.f32.mrf.mxu0
    %v820 = vpop.f32.mrf.mxu0
    %821 = vdwg.mxu0
    %vm822 = vcmask 64512
    %823 = vst.msk [vmem:[#allocation7] sm:$0xff] %vm822, %v817
    // Predicated region
    $region46: #{network_forward.1} parent=1 // pred_check
      _
    $region47: #{network_forward.1} parent=1 // pred_check_branch
      %825 = sbr.rel (0) target = $region49
    $region48: #{network_forward.1} parent=1 // pred_region
      %s827 = ssub.s32 128, 128
      %828 = vsyncadd [#allocation4], %s827
      %s830 = sshll.u32 [#allocation7], 4
      %s831 = int_to_ptr.vmem [resolvable:$true] %s830
      %833 = dma.vmem_to_hbm [thread:$0]  %s831, 128, %s9, [#allocation4]
    $region49: #{network_forward.1} parent=1 // pred_fallthru
      _
    // Predicated region
    $region50: #{network_forward.1} parent=1 // pred_check
      _
    $region51: #{network_forward.1} parent=1 // pred_check_branch
      %835 = sbr.rel (0) target = $region53
    $region52: #{network_forward.1} parent=1 // pred_region
      %836 = dma.done [#allocation4], 128
    $region53: #{network_forward.1} parent=1 // pred_fallthru
      _
    %837 = vsyncpa [#allocation3], 1
    %838 = vsyncpa [#allocation6], 1
    %839 = vsyncpa [#allocation4], 1

</llo_original>
